<compile_context>
chip_gen: v7x
topology: tpu7x:2x2x1
jax: 0.10.0
libtpu: 0.0.40
codegen_flags: <defaults>
</compile_context>

<pallas_src>
import jax
import jax.numpy as jnp
from jax.experimental import pallas as pl
from jax.experimental.pallas import tpu as pltpu

DROP_P = 0.1
SCALE = 1.0 / 0.125  # .div(0.125) == * 8.0

# Dropout via signed-int32 threshold: bits are uniform over all 2^32 int32
# values; keep iff bits >= THRESH  =>  P(keep) = 1 - DROP_P (to within 2^-32).
_DROP_THRESH_I32 = int(DROP_P * (1 << 32)) - (1 << 31)  # = -1718986919


def _sdpa_dropout_kernel(x_ref, y_ref, bits_ref, o_ref):
    """x_ref: (TM, K); y_ref: (N, K); bits_ref: (TM, N) int32; o_ref: (TM, K)."""
    x_bf = x_ref[...].astype(jnp.bfloat16)          # (TM, K)
    y_bf = y_ref[...].astype(jnp.bfloat16)          # (N, K)

    # v1 = x @ y^T ; v2 = v1 / 0.125   (bf16 MXU inputs, f32 accumulation)
    s = jax.lax.dot_general(
        x_bf, y_bf,
        dimension_numbers=(((1,), (1,)), ((), ())),
        preferred_element_type=jnp.float32,
    ) * SCALE                                        # (TM, N) f32

    # v3 = softmax(v2, axis=-1); the 1/(1 - p) dropout rescale is folded into
    # the (TM, 1) denominator instead of an extra full-tile multiply.
    s_max = jnp.max(s, axis=-1, keepdims=True)
    e = jnp.exp(s - s_max)
    denom = jnp.sum(e, axis=-1, keepdims=True)
    p = e * (1.0 / (denom * (1.0 - DROP_P)))         # (TM, N)

    # dropout(p=0.1): integer threshold compare + select.
    keep = bits_ref[...] >= jnp.int32(_DROP_THRESH_I32)
    p_dropped = jnp.where(keep, p, 0.0)

    # output = dropout_qk @ y
    o_ref[...] = jnp.dot(
        p_dropped.astype(jnp.bfloat16), y_bf,
        preferred_element_type=jnp.float32,
    ).astype(o_ref.dtype)                            # (TM, K)


def _row_tile(m):
    """Largest power-of-two row tile <= 512 that divides M (8-sublane aligned)."""
    for t in (512, 256, 128, 64, 32, 16, 8):
        if m % t == 0:
            return t
    return m


def model_forward(x, y, key):
    """x: (B, M, K) f32, y: (B, N, K) f32, key: JAX PRNG key -> (B, M, K) f32.

    The key must be fresh per call to match F.dropout's per-call randomness.
    """
    B, M, K = x.shape
    By, N, Ky = y.shape
    assert By == B and Ky == K

    # Host-side dropout randomness (portable: no TPU-only PRNG primitives).
    bits_u32 = jax.random.bits(key, (B, M, N), dtype=jnp.uint32)
    bits = jax.lax.bitcast_convert_type(bits_u32, jnp.int32)

    tm = _row_tile(M)
    grid = (B, M // tm)

    flops = 4 * B * M * N * K                       # two matmuls
    bytes_accessed = 4 * (2 * B * M * K + B * N * K + B * M * N)

    out = pl.pallas_call(
        _sdpa_dropout_kernel,
        out_shape=jax.ShapeDtypeStruct((B, M, K), x.dtype),
        grid=grid,
        in_specs=[
            pl.BlockSpec((None, tm, K), lambda b, m: (b, m, 0)),  # x row-tile
            pl.BlockSpec((None, N, K), lambda b, m: (b, 0, 0)),   # full y
            pl.BlockSpec((None, tm, N), lambda b, m: (b, m, 0)),  # dropout bits
        ],
        out_specs=pl.BlockSpec((None, tm, K), lambda b, m: (b, m, 0)),
        compiler_params=pltpu.CompilerParams(
            dimension_semantics=("parallel", "parallel")),
        cost_estimate=pl.CostEstimate(
            flops=flops,
            transcendentals=B * M * N,
            bytes_accessed=bytes_accessed),
    )(x, y, bits)
    return out


if __name__ == "__main__":
    key = jax.random.PRNGKey(0)
    kx, ky, kdrop = jax.random.split(key, 3)

    # x keeps the original (1, 16, 128); y is chosen consistent: (1, N, 128).
    B, M, K, N = 1, 16, 128, 8
    x = jax.random.normal(kx, (B, M, K), dtype=jnp.float32)
    y = jax.random.normal(ky, (B, N, K), dtype=jnp.float32)

    out = model_forward(x, y, kdrop)
    out = jax.block_until_ready(out)

    assert out.shape == (B, M, K)
    assert out.dtype == jnp.float32
    assert bool(jnp.all(jnp.isfinite(out)))
    print("KERNEL_OK")
</pallas_src>

<mosaic_0001>
module attributes {stable_mosaic.version = 11 : i64} {
  func.func @_sdpa_dropout_kernel(%arg0: i32, %arg1: i32, %arg2: memref<1x16x128xf32, #tpu.memory_space<vmem>>, %arg3: memref<1x8x128xf32, #tpu.memory_space<vmem>>, %arg4: memref<1x16x8xi32, #tpu.memory_space<vmem>>, %arg5: memref<1x16x128xf32, #tpu.memory_space<vmem>>) attributes {dimension_semantics = [#tpu.dimension_semantics<parallel>, #tpu.dimension_semantics<parallel>], iteration_bounds = array<i64: 1, 1>, scalar_prefetch = 0 : i64, scratch_operands = 0 : i64, tpu.core_type = #tpu.core_type<tc>, window_params = [{transform_indices = @transform_0, window_bounds = array<i64: 1, 16, 128>}, {transform_indices = @transform_1, window_bounds = array<i64: 1, 8, 128>}, {transform_indices = @transform_2, window_bounds = array<i64: 1, 16, 8>}, {transform_indices = @transform_3, window_bounds = array<i64: 1, 16, 128>}]} {
    %c0 = arith.constant 0 : index
    %c0_0 = arith.constant 0 : index
    %c0_1 = arith.constant 0 : index
    %0 = vector.load %arg2[%c0, %c0_0, %c0_1] : memref<1x16x128xf32, #tpu.memory_space<vmem>>, vector<1x16x128xf32>
    %1 = vector.shape_cast %0 : vector<1x16x128xf32> to vector<16x128xf32>
    %2 = arith.truncf %1 : vector<16x128xf32> to vector<16x128xbf16>
    %c0_2 = arith.constant 0 : index
    %c0_3 = arith.constant 0 : index
    %c0_4 = arith.constant 0 : index
    %3 = vector.load %arg3[%c0_2, %c0_3, %c0_4] : memref<1x8x128xf32, #tpu.memory_space<vmem>>, vector<1x8x128xf32>
    %4 = vector.shape_cast %3 : vector<1x8x128xf32> to vector<8x128xf32>
    %5 = arith.truncf %4 : vector<8x128xf32> to vector<8x128xbf16>
    %cst = arith.constant dense<0.000000e+00> : vector<16x8xf32>
    %6 = tpu.matmul %2, %5, %cst {dimension_numbers = #tpu.dot_dimension_numbers<[1], [1], [0], [0], [0, 0, 1, 0], [], []>} : vector<16x128xbf16>, vector<8x128xbf16>, vector<16x8xf32> -> vector<16x8xf32>
    %cst_5 = arith.constant 8.000000e+00 : f32
    %7 = vector.broadcast %cst_5 : f32 to vector<16x8xf32>
    %8 = arith.mulf %6, %7 : vector<16x8xf32>
    %cst_6 = arith.constant dense<0xFF800000> : vector<16xf32>
    %9 = vector.multi_reduction <maximumf>, %8, %cst_6 [1] : vector<16x8xf32> to vector<16xf32>
    %10 = vector.shape_cast %9 : vector<16xf32> to vector<16x1xf32>
    %11 = vector.broadcast %10 : vector<16x1xf32> to vector<16x8xf32>
    %12 = arith.subf %8, %11 : vector<16x8xf32>
    %13 = math.exp %12 : vector<16x8xf32>
    %cst_7 = arith.constant dense<0.000000e+00> : vector<16xf32>
    %14 = vector.multi_reduction <add>, %13, %cst_7 [1] : vector<16x8xf32> to vector<16xf32>
    %15 = vector.shape_cast %14 : vector<16xf32> to vector<16x1xf32>
    %cst_8 = arith.constant 0.899999976 : f32
    %16 = vector.broadcast %cst_8 : f32 to vector<16x1xf32>
    %17 = arith.mulf %15, %16 : vector<16x1xf32>
    %cst_9 = arith.constant 1.000000e+00 : f32
    %18 = vector.broadcast %cst_9 : f32 to vector<16x1xf32>
    %19 = arith.divf %18, %17 : vector<16x1xf32>
    %20 = vector.broadcast %19 : vector<16x1xf32> to vector<16x8xf32>
    %21 = arith.mulf %13, %20 : vector<16x8xf32>
    %c0_10 = arith.constant 0 : index
    %c0_11 = arith.constant 0 : index
    %c0_12 = arith.constant 0 : index
    %22 = vector.load %arg4[%c0_10, %c0_11, %c0_12] : memref<1x16x8xi32, #tpu.memory_space<vmem>>, vector<1x16x8xi32>
    %23 = vector.shape_cast %22 : vector<1x16x8xi32> to vector<16x8xi32>
    %c-1717986919_i32 = arith.constant -1717986919 : i32
    %24 = vector.broadcast %c-1717986919_i32 : i32 to vector<16x8xi32>
    %25 = arith.cmpi sge, %23, %24 : vector<16x8xi32>
    %cst_13 = arith.constant 0.000000e+00 : f32
    %26 = vector.broadcast %cst_13 : f32 to vector<16x8xf32>
    %27 = arith.select %25, %21, %26 : vector<16x8xi1>, vector<16x8xf32>
    %28 = arith.truncf %27 : vector<16x8xf32> to vector<16x8xbf16>
    %cst_14 = arith.constant dense<0.000000e+00> : vector<16x128xf32>
    %29 = tpu.matmul %28, %5, %cst_14 {dimension_numbers = #tpu.dot_dimension_numbers<[1], [0], [0], [1], [0, 0, 1, 1], [], []>} : vector<16x8xbf16>, vector<8x128xbf16>, vector<16x128xf32> -> vector<16x128xf32>
    %c0_15 = arith.constant 0 : index
    %c0_16 = arith.constant 0 : index
    %c0_17 = arith.constant 0 : index
    %30 = vector.load %arg5[%c0_15, %c0_16, %c0_17] : memref<1x16x128xf32, #tpu.memory_space<vmem>>, vector<1x16x128xf32>
    %31 = vector.shape_cast %30 : vector<1x16x128xf32> to vector<16x128xf32>
    %32 = vector.shape_cast %29 : vector<16x128xf32> to vector<1x16x128xf32>
    tpu.vector_store %arg5[%c0_15, %c0_16, %c0_17], %32 {strides = array<i32>} : memref<1x16x128xf32, #tpu.memory_space<vmem>>, vector<1x16x128xf32>,
    return
  }
  func.func @transform_0(%arg0: i32, %arg1: i32) -> (i32, i32, i32) {
    %c0_i32 = arith.constant 0 : i32
    %c0_i32_0 = arith.constant 0 : i32
    return %arg0, %arg1, %c0_i32 : i32, i32, i32
  }
  func.func @transform_1(%arg0: i32, %arg1: i32) -> (i32, i32, i32) {
    %c0_i32 = arith.constant 0 : i32
    %c0_i32_0 = arith.constant 0 : i32
    %c0_i32_1 = arith.constant 0 : i32
    return %arg0, %c0_i32, %c0_i32_0 : i32, i32, i32
  }
  func.func @transform_2(%arg0: i32, %arg1: i32) -> (i32, i32, i32) {
    %c0_i32 = arith.constant 0 : i32
    %c0_i32_0 = arith.constant 0 : i32
    return %arg0, %arg1, %c0_i32 : i32, i32, i32
  }
  func.func @transform_3(%arg0: i32, %arg1: i32) -> (i32, i32, i32) {
    %c0_i32 = arith.constant 0 : i32
    %c0_i32_0 = arith.constant 0 : i32
    return %arg0, %arg1, %c0_i32 : i32, i32, i32
  }
}

</mosaic_0001>

<llo_original>
// kernel: tpu_custom_call.1
$region0: #{tpu_custom_call.1}
  #allocation0 [shape = 'u32[]', space=smem, size = 0x4, offset = 0x4, fixed_abs, tag = 'smem constant byte address 0x4 - core index']
  #allocation1 [shape = 'u32[144,128]{1,0:T(1,128)}', space=vmem, size = 0x12000, scoped, tag = 'internal scratch']
  %s0 = inlined_call_operand.vmem [shape: f32[1,16,128], index: 0, kind: input, shape index: {}]
  %s1 = inlined_call_operand.vmem [shape: f32[1,8,128], index: 1, kind: input, shape index: {}]
  %s2 = inlined_call_operand.vmem [shape: s32[1,16,8], index: 2, kind: input, shape index: {}]
  %s3 = inlined_call_operand.hbm [shape: f32[1,16,128], index: 3, kind: output, shape index: {}]
  %s4 = sld [smem:[#allocation0]]
  $region22: #{tpu_custom_call.1} parent=0
    _
  %s6 = ssub.s32 1, %s4
  %s7 = scalar_select 0, %s6, %s4
  $region1: #{tpu_custom_call.1} parent=0
    #allocation2 [shape = 'u8[8192]{0}', space=vmem, size = 0x2000, scoped, tag = 'output window, operand 0, single buffered']
    #allocation3 [shape = 's32[1]{0}', space=sflag, size = 0x4, scoped, tag = 'scoped memory for tpu_custom_call.1']
    %8 = vsyncpa [#allocation3], 0
    // Predicated region
    $region2: #{tpu_custom_call.1} parent=1 // pred_check
      _
    $region3: #{tpu_custom_call.1} parent=1 // pred_check_branch
      %10 = sbr.rel (0) target = $region5
    $region4: #{tpu_custom_call.1} parent=1 // pred_region
      _
    $region5: #{tpu_custom_call.1} parent=1 // pred_fallthru
      _
    // Predicated region
    $region6: #{tpu_custom_call.1} parent=1 // pred_check
      _
    $region7: #{tpu_custom_call.1} parent=1 // pred_check_branch
      %12 = sbr.rel (0) target = $region9
    $region8: #{tpu_custom_call.1} parent=1 // pred_region
      _
    $region9: #{tpu_custom_call.1} parent=1 // pred_fallthru
      _
    // Predicated region
    $region10: #{tpu_custom_call.1} parent=1 // pred_check
      _
    $region11: #{tpu_custom_call.1} parent=1 // pred_check_branch
      %14 = sbr.rel (0) target = $region13
    $region12: #{tpu_custom_call.1} parent=1 // pred_region
      _
    $region13: #{tpu_custom_call.1} parent=1 // pred_fallthru
      _
    %v16 = vld [vmem:[%s0] sm:$0xff]
    %v17 = vld [vmem:[%s0 + $0x8] sm:$0xff]
    %v18 = vpack.c.bf16 %v17, %v16
    %v19 = vld [vmem:[%s1] sm:$0xff]
    %v20 = vpack.c.bf16 %v19, %v19
    %21 = vmatprep.subr.bf16.mxu0 0
    %22 = vmatpush1.bf16.xpose.msra.mxu0 %v20
    %23 = vmatprep.subr.bf16.mxu0 0
    %24 = vmatpush1.bf16.xpose.msra.mxu0 0
    %25 = vmatprep.subr.bf16.mxu0 0
    %26 = vmatpush1.bf16.xpose.msra.mxu0 0
    %27 = vmatprep.subr.bf16.mxu0 0
    %28 = vmatpush1.bf16.xpose.msra.mxu0 0
    %29 = vmatprep.subr.bf16.mxu0 0
    %30 = vmatpush1.bf16.xpose.msra.mxu0 0
    %31 = vmatprep.subr.bf16.mxu0 0
    %32 = vmatpush1.bf16.xpose.msra.mxu0 0
    %33 = vmatprep.subr.bf16.mxu0 0
    %34 = vmatpush1.bf16.xpose.msra.mxu0 0
    %35 = vmatprep.subr.bf16.mxu0 0
    %36 = vmatpush1.bf16.xpose.msra.mxu0 0
    %37 = vmatprep.subr.bf16.mxu0 0
    %38 = vmatpush1.bf16.xpose.msra.mxu0 0
    %39 = vmatprep.subr.bf16.mxu0 0
    %40 = vmatpush1.bf16.xpose.msra.mxu0 0
    %41 = vmatprep.subr.bf16.mxu0 0
    %42 = vmatpush1.bf16.xpose.msra.mxu0 0
    %43 = vmatprep.subr.bf16.mxu0 0
    %44 = vmatpush1.bf16.xpose.msra.mxu0 0
    %45 = vmatprep.subr.bf16.mxu0 0
    %46 = vmatpush1.bf16.xpose.msra.mxu0 0
    %47 = vmatprep.subr.bf16.mxu0 0
    %48 = vmatpush1.bf16.xpose.msra.mxu0 0
    %49 = vmatprep.subr.bf16.mxu0 0
    %50 = vmatpush1.bf16.xpose.msra.mxu0 0
    %51 = vmatprep.subr.bf16.mxu0 0
    %52 = vmatpush1.bf16.xpose.msra.mxu0 0
    %53 = vmatprep.mubr.bf16.mxu0 0
    %54 = vmatmul.mubr.bf16.gmra.mrb[0].mxu0 %v18
    %v55 = vpop.f32.mrb[0].mxu0
    %v56 = vadd.f32 0.0, %v55
    %v57 = vpop.f32.mrb[0].mxu0
    %v58 = vpop.f32.mrb[0].mxu0
    %v59 = vadd.f32 0.0, %v58
    %v60 = vpop.f32.mrb[0].mxu0
    %61 = vdwg.mxu0
    %v62 = vmul.f32 %v56, 8.0
    %v63 = vmul.f32 %v59, 8.0
    %vm64 = vcmask 64512
    %v65 = vsel %vm64, %v62, -inf
    %66 = vmax.xlane.f32.xlu0 %v65
    %v67 = vpop.xlane.xlu0 %66
    %v68 = vsel %vm64, %v63, -inf
    %69 = vmax.xlane.f32.xlu0 %v68
    %v70 = vpop.xlane.xlu0 %69
    %v71 = vsub.f32 %v62, %v67
    %v72 = vsub.f32 %v63, %v70
    %v73 = vmul.f32 %v71, 1.442695
    %v74 = vpow.pop %v73
    %v75 = vmul.f32 %v72, 1.442695
    %v76 = vpow.pop %v75
    %v77 = vsel %vm64, %v74, 0.0
    %78 = vadd.xlane.f32.xlu0 %v77
    %v79 = vpop.xlane.xlu0 %78
    %v80 = vsel %vm64, %v76, 0.0
    %81 = vadd.xlane.f32.xlu0 %v80
    %v82 = vpop.xlane.xlu0 %81
    %v83 = vmul.f32 %v79, 0.9
    %v84 = vmul.f32 %v82, 0.9
    %v85 = vrcp.pop %v83
    %v86 = vmul.f32 1.0, %v85
    %v87 = vrcp.pop %v84
    %v88 = vmul.f32 1.0, %v87
    %v89 = vmul.f32 %v74, %v86
    %v90 = vmul.f32 %v76, %v88
    %v91 = vld [vmem:[%s2] sm:$0xff]
    %v92 = vld [vmem:[%s2 + $0x8] sm:$0xff]
    %vm93 = vcmp.ge.s32.totalorder %v91, 2576980377
    %vm94 = vcmp.ge.s32.totalorder %v92, 2576980377
    %v95 = vsel %vm93, %v89, 0.0
    %v96 = vsel %vm94, %v90, 0.0
    %v97 = vpack.c.bf16 %v96, %v95
    %v99 = vsel %vm64, %v97, 0
    %vm101 = vcmask 1043456
    %v103 = vsel %vm101, %v20, 0
    %105 = vmatprep.subr.bf16.mxu0 0
    %106 = vmatpush1.bf16.msra.mxu0 %v103
    %107 = vmatprep.subr.bf16.mxu0 0
    %108 = vmatpush1.bf16.msra.mxu0 0
    %109 = vmatprep.subr.bf16.mxu0 0
    %110 = vmatpush1.bf16.msra.mxu0 0
    %111 = vmatprep.subr.bf16.mxu0 0
    %112 = vmatpush1.bf16.msra.mxu0 0
    %113 = vmatprep.subr.bf16.mxu0 0
    %114 = vmatpush1.bf16.msra.mxu0 0
    %115 = vmatprep.subr.bf16.mxu0 0
    %116 = vmatpush1.bf16.msra.mxu0 0
    %117 = vmatprep.subr.bf16.mxu0 0
    %118 = vmatpush1.bf16.msra.mxu0 0
    %119 = vmatprep.subr.bf16.mxu0 0
    %120 = vmatpush1.bf16.msra.mxu0 0
    %121 = vmatprep.subr.bf16.mxu0 0
    %122 = vmatpush1.bf16.msra.mxu0 0
    %123 = vmatprep.subr.bf16.mxu0 0
    %124 = vmatpush1.bf16.msra.mxu0 0
    %125 = vmatprep.subr.bf16.mxu0 0
    %126 = vmatpush1.bf16.msra.mxu0 0
    %127 = vmatprep.subr.bf16.mxu0 0
    %128 = vmatpush1.bf16.msra.mxu0 0
    %129 = vmatprep.subr.bf16.mxu0 0
    %130 = vmatpush1.bf16.msra.mxu0 0
    %131 = vmatprep.subr.bf16.mxu0 0
    %132 = vmatpush1.bf16.msra.mxu0 0
    %133 = vmatprep.subr.bf16.mxu0 0
    %134 = vmatpush1.bf16.msra.mxu0 0
    %135 = vmatprep.subr.bf16.mxu0 0
    %136 = vmatpush1.bf16.msra.mxu0 0
    %137 = vmatprep.mubr.bf16.mxu0 0
    %138 = vmatmul.mubr.bf16.gmra.mrb[0].mxu0 %v99
    %v139 = vpop.f32.mrb[0].mxu0
    %v140 = vadd.f32 0.0, %v139
    %v141 = vpop.f32.mrb[0].mxu0
    %v142 = vpop.f32.mrb[0].mxu0
    %v143 = vadd.f32 0.0, %v142
    %v144 = vpop.f32.mrb[0].mxu0
    %145 = vdwg.mxu0
    %146 = vst [vmem:[#allocation2] sm:$0xff] %v140
    %147 = vst [vmem:[#allocation2 + $0x8] sm:$0xff] %v143
    // Predicated region
    $region14: #{tpu_custom_call.1} parent=1 // pred_check
      _
    $region15: #{tpu_custom_call.1} parent=1 // pred_check_branch
      %149 = sbr.rel (0) target = $region17
    $region16: #{tpu_custom_call.1} parent=1 // pred_region
      %s151 = ssub.s32 256, 256
      %152 = vsyncadd [#allocation3], %s151
      %s153 = sshll.u32 [#allocation2], 4
      %s154 = int_to_ptr.vmem [resolvable:$true] %s153
      %159 = dma.vmem_to_hbm [thread:$0]  %s154, 256, %s3, [#allocation3], 128, 128, 8
    $region17: #{tpu_custom_call.1} parent=1 // pred_fallthru
      _
    // Predicated region
    $region18: #{tpu_custom_call.1} parent=1 // pred_check
      _
    $region19: #{tpu_custom_call.1} parent=1 // pred_check_branch
      %161 = sbr.rel (0) target = $region21
    $region20: #{tpu_custom_call.1} parent=1 // pred_region
      %162 = dma.done [#allocation3], 256
    $region21: #{tpu_custom_call.1} parent=1 // pred_fallthru
      _
    %163 = vsyncpa [#allocation3], 1

</llo_original>
